<compile_context>
chip_gen: v7x
topology: tpu7x:2x2x1
jax: 0.10.0
libtpu: 0.0.40
codegen_flags: <defaults>
</compile_context>

<pallas_src>
import functools
import math

import jax
import jax.numpy as jnp
from jax.experimental import pallas as pl
from jax.experimental.pallas import tpu as pltpu

_SUBLANES = 8
_LANES = 128
_TARGET_BLOCK_BYTES = 2 * 1024 * 1024  # ~2 MiB (f32) of image data per grid step


def _tv_kernel(h, x_ref, o_ref):
    """x_ref: (planes_per_block * h, w) slab of whole image planes.

    o_ref: (1, 8, 128) per-block partial-sum tile (value at [0, 0, 0], zeros
    elsewhere, so the wrapper can simply jnp.sum all partials).
    """
    x = x_ref[...].astype(jnp.float32)  # upcast in-kernel; DMA stays in input dtype
    r, w = x.shape

    # rolled[i] = x[i-1] along the given axis (jnp.roll semantics). The wrap
    # positions (col 0 / first row of each plane) are masked out below, so only
    # true in-plane neighbour differences are counted.
    left = pltpu.roll(x, 1, axis=1)  # left[r, c] = x[r, c-1]
    up = pltpu.roll(x, 1, axis=0)    # up[r, c]   = x[r-1, c]

    col = jax.lax.broadcasted_iota(jnp.int32, (r, w), 1)
    row = jax.lax.broadcasted_iota(jnp.int32, (r, w), 0)

    dw = jnp.where(col > 0, jnp.abs(x - left), 0.0)        # horizontal diffs
    dh = jnp.where(row % h > 0, jnp.abs(x - up), 0.0)      # vertical diffs, masked at
                                                           # plane boundaries (row % h == 0)
    total = jnp.sum(dw + dh)                               # one fused reduction per block

    # Lane-dense output tile: partial sum at [0, 0], zeros elsewhere.
    sub = jax.lax.broadcasted_iota(jnp.int32, (_SUBLANES, _LANES), 0)
    lane = jax.lax.broadcasted_iota(jnp.int32, (_SUBLANES, _LANES), 1)
    o_ref[0] = jnp.where((sub == 0) & (lane == 0), total, 0.0)


def total_variation_loss(x: jax.Array, alpha: float) -> jax.Array:
    """alpha * (sum |X[:,:,:,:-1]-X[:,:,:,1:]| + sum |X[:,:,:-1,:]-X[:,:,1:,:]|)."""
    n, c, h, w = x.shape
    nc = n * c
    x2 = x.reshape(nc * h, w)  # pure metadata reshape in HBM

    # Planes per block: as many whole (h, w) planes as fit ~_TARGET_BLOCK_BYTES of
    # f32 data, rounded so rows-per-block (b*h) is a multiple of 8 (sublane tiling).
    plane_f32_bytes = h * w * 4
    b_unit = 8 // math.gcd(h, 8)                     # smallest plane count with b*h % 8 == 0
    b = max(1, _TARGET_BLOCK_BYTES // plane_f32_bytes)
    b = max(b_unit, (b // b_unit) * b_unit)
    b = min(b, pl.cdiv(nc, b_unit) * b_unit)         # no point exceeding (padded) plane count
    # TODO(synk): for single planes too large for VMEM, tile H into row blocks
    # with a 1-row halo instead of taking whole planes per block.

    nc_pad = pl.cdiv(nc, b) * b
    if nc_pad != nc:
        # Zero padding planes contribute exactly 0 (their diffs are 0 and the
        # cross-plane rows are masked in the kernel).
        x2 = jnp.pad(x2, ((0, (nc_pad - nc) * h), (0, 0)))
    num_blocks = nc_pad // b
    rows_per_block = b * h

    block_f32_bytes = rows_per_block * w * 4
    vmem_limit = int(min(64 * 1024 * 1024, max(32 * 1024 * 1024, 12 * block_f32_bytes)))

    cost = pl.CostEstimate(
        flops=6 * nc * h * w,
        transcendentals=0,
        bytes_accessed=nc_pad * h * w * x.dtype.itemsize
        + num_blocks * _SUBLANES * _LANES * 4,
    )

    partials = pl.pallas_call(
        functools.partial(_tv_kernel, h),
        out_shape=jax.ShapeDtypeStruct((num_blocks, _SUBLANES, _LANES), jnp.float32),
        grid=(num_blocks,),
        in_specs=[pl.BlockSpec((rows_per_block, w), lambda i: (i, 0))],
        out_specs=pl.BlockSpec((1, _SUBLANES, _LANES), lambda i: (i, 0, 0)),
        compiler_params=pltpu.CompilerParams(
            dimension_semantics=("parallel",),  # independent per-block partial sums
            vmem_limit_bytes=vmem_limit,
        ),
        cost_estimate=cost,
    )(x2)

    # alpha applied outside the kernel: no recompile per alpha value.
    return jnp.float32(alpha) * jnp.sum(partials)


def _reference(x, alpha):
    return alpha * (
        jnp.sum(jnp.abs(x[:, :, :, :-1] - x[:, :, :, 1:]))
        + jnp.sum(jnp.abs(x[:, :, :-1, :] - x[:, :, 1:, :]))
    )


if __name__ == "__main__":
    key = jax.random.PRNGKey(0)
    alpha = 0.5
    x = jax.random.normal(key, (2, 4, 16, 16), dtype=jnp.float32)

    loss = jax.block_until_ready(total_variation_loss(x, alpha))

    ref = _reference(x, alpha)
    assert jnp.allclose(loss, ref, rtol=1e-5, atol=1e-5), (loss, ref)
    print("KERNEL_OK")
</pallas_src>

<mosaic_0001>
module attributes {stable_mosaic.version = 11 : i64} {
  func.func @_tv_kernel(%arg0: i32, %arg1: memref<128x16xf32, #tpu.memory_space<vmem>>, %arg2: memref<1x8x128xf32, #tpu.memory_space<vmem>>) attributes {dimension_semantics = [#tpu.dimension_semantics<parallel>], iteration_bounds = array<i64: 1>, scalar_prefetch = 0 : i64, scratch_operands = 0 : i64, tpu.core_type = #tpu.core_type<tc>, window_params = [{transform_indices = @transform_0, window_bounds = array<i64: 128, 16>}, {transform_indices = @transform_1, window_bounds = array<i64: 1, 8, 128>}]} {
    %c0 = arith.constant 0 : index
    %c0_0 = arith.constant 0 : index
    %0 = vector.load %arg1[%c0, %c0_0] : memref<128x16xf32, #tpu.memory_space<vmem>>, vector<128x16xf32>
    %c1_i32 = arith.constant 1 : i32
    %1 = tpu.dynamic_rotate %0 by %c1_i32 dim 1 : vector<128x16xf32>, i32 -> vector<128x16xf32>
    %c1_i32_1 = arith.constant 1 : i32
    %2 = tpu.dynamic_rotate %0 by %c1_i32_1 dim 0 : vector<128x16xf32>, i32 -> vector<128x16xf32>
    %3 = tpu.iota {dimensions = array<i32: 1>} : vector<128x16xi32>
    %4 = tpu.iota {dimensions = array<i32: 0>} : vector<128x16xi32>
    %c0_i32 = arith.constant 0 : i32
    %5 = vector.broadcast %c0_i32 : i32 to vector<128x16xi32>
    %6 = arith.cmpi sgt, %3, %5 : vector<128x16xi32>
    %7 = arith.subf %0, %1 : vector<128x16xf32>
    %8 = math.absf %7 : vector<128x16xf32>
    %cst = arith.constant 0.000000e+00 : f32
    %9 = vector.broadcast %cst : f32 to vector<128x16xf32>
    %10 = arith.select %6, %8, %9 : vector<128x16xi1>, vector<128x16xf32>
    %c16_i32 = arith.constant 16 : i32
    %c0_i32_2 = arith.constant 0 : i32
    %11 = arith.cmpi eq, %c16_i32, %c0_i32_2 : i32
    %c1_i32_3 = arith.constant 1 : i32
    %12 = arith.select %11, %c1_i32_3, %c16_i32 : i32
    %13 = vector.broadcast %12 : i32 to vector<128x16xi32>
    %14 = arith.remsi %4, %13 : vector<128x16xi32>
    %c0_i32_4 = arith.constant 0 : i32
    %15 = vector.broadcast %c0_i32_4 : i32 to vector<128x16xi32>
    %16 = arith.cmpi ne, %14, %15 : vector<128x16xi32>
    %c0_i32_5 = arith.constant 0 : i32
    %17 = vector.broadcast %c0_i32_5 : i32 to vector<128x16xi32>
    %18 = arith.cmpi slt, %14, %17 : vector<128x16xi32>
    %c0_i32_6 = arith.constant 0 : i32
    %19 = arith.cmpi slt, %12, %c0_i32_6 : i32
    %20 = vector.broadcast %19 : i1 to vector<128x16xi1>
    %21 = vector.broadcast %20 : vector<128x16xi1> to vector<128x16xi1>
    %22 = arith.xori %18, %21 : vector<128x16xi1>
    %23 = arith.andi %22, %16 : vector<128x16xi1>
    %24 = vector.broadcast %12 : i32 to vector<128x16xi32>
    %25 = arith.addi %14, %24 : vector<128x16xi32>
    %26 = arith.select %23, %25, %14 : vector<128x16xi1>, vector<128x16xi32>
    %c0_i32_7 = arith.constant 0 : i32
    %27 = vector.broadcast %c0_i32_7 : i32 to vector<128x16xi32>
    %28 = arith.cmpi sgt, %26, %27 : vector<128x16xi32>
    %29 = arith.subf %0, %2 : vector<128x16xf32>
    %30 = math.absf %29 : vector<128x16xf32>
    %cst_8 = arith.constant 0.000000e+00 : f32
    %31 = vector.broadcast %cst_8 : f32 to vector<128x16xf32>
    %32 = arith.select %28, %30, %31 : vector<128x16xi1>, vector<128x16xf32>
    %33 = arith.addf %10, %32 : vector<128x16xf32>
    %34 = vector.shape_cast %33 : vector<128x16xf32> to vector<1x128x16xf32>
    %cst_9 = arith.constant dense<0.000000e+00> : vector<1xf32>
    %35 = vector.multi_reduction <add>, %34, %cst_9 [1, 2] : vector<1x128x16xf32> to vector<1xf32>
    %36 = vector.shape_cast %35 : vector<1xf32> to vector<1x1x1xf32>
    %37 = vector.extract %36[0, 0, 0] : f32 from vector<1x1x1xf32>
    %38 = tpu.iota {dimensions = array<i32: 0>} : vector<8x128xi32>
    %39 = tpu.iota {dimensions = array<i32: 1>} : vector<8x128xi32>
    %c0_i32_10 = arith.constant 0 : i32
    %40 = vector.broadcast %c0_i32_10 : i32 to vector<8x128xi32>
    %41 = arith.cmpi eq, %38, %40 : vector<8x128xi32>
    %c0_i32_11 = arith.constant 0 : i32
    %42 = vector.broadcast %c0_i32_11 : i32 to vector<8x128xi32>
    %43 = arith.cmpi eq, %39, %42 : vector<8x128xi32>
    %44 = arith.andi %41, %43 : vector<8x128xi1>
    %cst_12 = arith.constant 0.000000e+00 : f32
    %45 = vector.broadcast %37 : f32 to vector<8x128xf32>
    %46 = vector.broadcast %cst_12 : f32 to vector<8x128xf32>
    %47 = arith.select %44, %45, %46 : vector<8x128xi1>, vector<8x128xf32>
    %c0_13 = arith.constant 0 : index
    %c0_14 = arith.constant 0 : index
    %c0_15 = arith.constant 0 : index
    %48 = vector.load %arg2[%c0_13, %c0_14, %c0_15] : memref<1x8x128xf32, #tpu.memory_space<vmem>>, vector<1x8x128xf32>
    %49 = vector.shape_cast %48 : vector<1x8x128xf32> to vector<8x128xf32>
    %50 = vector.shape_cast %47 : vector<8x128xf32> to vector<1x8x128xf32>
    tpu.vector_store %arg2[%c0_13, %c0_14, %c0_15], %50 {strides = array<i32>} : memref<1x8x128xf32, #tpu.memory_space<vmem>>, vector<1x8x128xf32>,
    return
  }
  func.func @transform_0(%arg0: i32) -> (i32, i32) {
    %c0_i32 = arith.constant 0 : i32
    %c0_i32_0 = arith.constant 0 : i32
    return %arg0, %c0_i32 : i32, i32
  }
  func.func @transform_1(%arg0: i32) -> (i32, i32, i32) {
    %c0_i32 = arith.constant 0 : i32
    %c0_i32_0 = arith.constant 0 : i32
    %c0_i32_1 = arith.constant 0 : i32
    return %arg0, %c0_i32, %c0_i32_0 : i32, i32, i32
  }
}

</mosaic_0001>

<llo_original>
// kernel: tpu_custom_call.1
$region0: #{tpu_custom_call.1}
  #allocation0 [shape = 'u32[]', space=smem, size = 0x4, offset = 0x4, fixed_abs, tag = 'smem constant byte address 0x4 - core index']
  #allocation1 [shape = 'u32[144,128]{1,0:T(1,128)}', space=vmem, size = 0x12000, scoped, tag = 'internal scratch']
  %s0 = inlined_call_operand.vmem [shape: f32[128,16], index: 0, kind: input, shape index: {}]
  %s1 = inlined_call_operand.hbm [shape: f32[1,8,128], index: 1, kind: output, shape index: {}]
  %s2 = sld [smem:[#allocation0]]
  $region14: #{tpu_custom_call.1} parent=0
    _
  %s4 = ssub.s32 1, %s2
  %s5 = scalar_select 0, %s4, %s2
  $region1: #{tpu_custom_call.1} parent=0
    #allocation2 [shape = 'u8[4096]{0}', space=vmem, size = 0x1000, scoped, tag = 'output window, operand 0, single buffered']
    #allocation3 [shape = 's32[1]{0}', space=sflag, size = 0x4, scoped, tag = 'scoped memory for tpu_custom_call.1']
    %6 = vsyncpa [#allocation3], 0
    // Predicated region
    $region2: #{tpu_custom_call.1} parent=1 // pred_check
      _
    $region3: #{tpu_custom_call.1} parent=1 // pred_check_branch
      %8 = sbr.rel (0) target = $region5
    $region4: #{tpu_custom_call.1} parent=1 // pred_region
      _
    $region5: #{tpu_custom_call.1} parent=1 // pred_fallthru
      _
    %v9 = vld [vmem:[%s0] sm:$0xff]
    %v10 = vld [vmem:[%s0 + $0x8] sm:$0xff]
    %v11 = vld [vmem:[%s0 + $0x10] sm:$0xff]
    %v12 = vld [vmem:[%s0 + $0x18] sm:$0xff]
    %v13 = vld [vmem:[%s0 + $0x20] sm:$0xff]
    %v14 = vld [vmem:[%s0 + $0x28] sm:$0xff]
    %v15 = vld [vmem:[%s0 + $0x30] sm:$0xff]
    %v16 = vld [vmem:[%s0 + $0x38] sm:$0xff]
    %v17 = vld [vmem:[%s0 + $0x40] sm:$0xff]
    %v18 = vld [vmem:[%s0 + $0x48] sm:$0xff]
    %v19 = vld [vmem:[%s0 + $0x50] sm:$0xff]
    %v20 = vld [vmem:[%s0 + $0x58] sm:$0xff]
    %v21 = vld [vmem:[%s0 + $0x60] sm:$0xff]
    %v22 = vld [vmem:[%s0 + $0x68] sm:$0xff]
    %v23 = vld [vmem:[%s0 + $0x70] sm:$0xff]
    %v24 = vld [vmem:[%s0 + $0x78] sm:$0xff]
    %vm25 = vcmask 1047680
    %26 = vrot.lane.b32.xlu0 %v9, 16
    %v27 = vpop.permute.xlu0 %26
    %v28 = vsel %vm25, %v27, %v9
    %29 = vrot.lane.b32.xlu0 %v10, 16
    %v30 = vpop.permute.xlu0 %29
    %v31 = vsel %vm25, %v30, %v10
    %32 = vrot.lane.b32.xlu0 %v11, 16
    %v33 = vpop.permute.xlu0 %32
    %v34 = vsel %vm25, %v33, %v11
    %35 = vrot.lane.b32.xlu0 %v12, 16
    %v36 = vpop.permute.xlu0 %35
    %v37 = vsel %vm25, %v36, %v12
    %38 = vrot.lane.b32.xlu0 %v13, 16
    %v39 = vpop.permute.xlu0 %38
    %v40 = vsel %vm25, %v39, %v13
    %41 = vrot.lane.b32.xlu0 %v14, 16
    %v42 = vpop.permute.xlu0 %41
    %v43 = vsel %vm25, %v42, %v14
    %44 = vrot.lane.b32.xlu0 %v15, 16
    %v45 = vpop.permute.xlu0 %44
    %v46 = vsel %vm25, %v45, %v15
    %47 = vrot.lane.b32.xlu0 %v16, 16
    %v48 = vpop.permute.xlu0 %47
    %v49 = vsel %vm25, %v48, %v16
    %50 = vrot.lane.b32.xlu0 %v17, 16
    %v51 = vpop.permute.xlu0 %50
    %v52 = vsel %vm25, %v51, %v17
    %53 = vrot.lane.b32.xlu0 %v18, 16
    %v54 = vpop.permute.xlu0 %53
    %v55 = vsel %vm25, %v54, %v18
    %56 = vrot.lane.b32.xlu0 %v19, 16
    %v57 = vpop.permute.xlu0 %56
    %v58 = vsel %vm25, %v57, %v19
    %59 = vrot.lane.b32.xlu0 %v20, 16
    %v60 = vpop.permute.xlu0 %59
    %v61 = vsel %vm25, %v60, %v20
    %62 = vrot.lane.b32.xlu0 %v21, 16
    %v63 = vpop.permute.xlu0 %62
    %v64 = vsel %vm25, %v63, %v21
    %65 = vrot.lane.b32.xlu0 %v22, 16
    %v66 = vpop.permute.xlu0 %65
    %v67 = vsel %vm25, %v66, %v22
    %68 = vrot.lane.b32.xlu0 %v23, 16
    %v69 = vpop.permute.xlu0 %68
    %v70 = vsel %vm25, %v69, %v23
    %71 = vrot.lane.b32.xlu0 %v24, 16
    %v72 = vpop.permute.xlu0 %71
    %v73 = vsel %vm25, %v72, %v24
    %74 = vrot.lane.b32.xlu0 %v28, 16
    %v75 = vpop.permute.xlu0 %74
    %76 = vrot.lane.b32.xlu0 %v31, 16
    %v77 = vpop.permute.xlu0 %76
    %78 = vrot.lane.b32.xlu0 %v34, 16
    %v79 = vpop.permute.xlu0 %78
    %80 = vrot.lane.b32.xlu0 %v37, 16
    %v81 = vpop.permute.xlu0 %80
    %82 = vrot.lane.b32.xlu0 %v40, 16
    %v83 = vpop.permute.xlu0 %82
    %84 = vrot.lane.b32.xlu0 %v43, 16
    %v85 = vpop.permute.xlu0 %84
    %86 = vrot.lane.b32.xlu0 %v46, 16
    %v87 = vpop.permute.xlu0 %86
    %88 = vrot.lane.b32.xlu0 %v49, 16
    %v89 = vpop.permute.xlu0 %88
    %90 = vrot.lane.b32.xlu0 %v52, 16
    %v91 = vpop.permute.xlu0 %90
    %92 = vrot.lane.b32.xlu0 %v55, 16
    %v93 = vpop.permute.xlu0 %92
    %94 = vrot.lane.b32.xlu0 %v58, 16
    %v95 = vpop.permute.xlu0 %94
    %96 = vrot.lane.b32.xlu0 %v61, 16
    %v97 = vpop.permute.xlu0 %96
    %98 = vrot.lane.b32.xlu0 %v64, 16
    %v99 = vpop.permute.xlu0 %98
    %100 = vrot.lane.b32.xlu0 %v67, 16
    %v101 = vpop.permute.xlu0 %100
    %102 = vrot.lane.b32.xlu0 %v70, 16
    %v103 = vpop.permute.xlu0 %102
    %104 = vrot.lane.b32.xlu0 %v73, 16
    %v105 = vpop.permute.xlu0 %104
    %v106 = vsel %vm25, %v75, %v9
    %v107 = vsel %vm25, %v77, %v10
    %v108 = vsel %vm25, %v79, %v11
    %v109 = vsel %vm25, %v81, %v12
    %v110 = vsel %vm25, %v83, %v13
    %v111 = vsel %vm25, %v85, %v14
    %v112 = vsel %vm25, %v87, %v15
    %v113 = vsel %vm25, %v89, %v16
    %v114 = vsel %vm25, %v91, %v17
    %v115 = vsel %vm25, %v93, %v18
    %v116 = vsel %vm25, %v95, %v19
    %v117 = vsel %vm25, %v97, %v20
    %v118 = vsel %vm25, %v99, %v21
    %v119 = vsel %vm25, %v101, %v22
    %v120 = vsel %vm25, %v103, %v23
    %v121 = vsel %vm25, %v105, %v24
    %v122 = vrot.slane %v9, 7
    %v123 = vrot.slane %v10, 7
    %v124 = vrot.slane %v11, 7
    %v125 = vrot.slane %v12, 7
    %v126 = vrot.slane %v13, 7
    %v127 = vrot.slane %v14, 7
    %v128 = vrot.slane %v15, 7
    %v129 = vrot.slane %v16, 7
    %v130 = vrot.slane %v17, 7
    %v131 = vrot.slane %v18, 7
    %v132 = vrot.slane %v19, 7
    %v133 = vrot.slane %v20, 7
    %v134 = vrot.slane %v21, 7
    %v135 = vrot.slane %v22, 7
    %v136 = vrot.slane %v23, 7
    %v137 = vrot.slane %v24, 7
    %v138 = vlaneseq
    %v139 = vshrl.u32 %v138, 7
    %vm140 = vcmp.lt.s32.totalorder %v139, 1
    %v141 = vsel %vm140, %v136, %v137
    %v142 = vsel %vm140, %v135, %v136
    %v143 = vsel %vm140, %v134, %v135
    %v144 = vsel %vm140, %v133, %v134
    %v145 = vsel %vm140, %v132, %v133
    %v146 = vsel %vm140, %v131, %v132
    %v147 = vsel %vm140, %v130, %v131
    %v148 = vsel %vm140, %v129, %v130
    %v149 = vsel %vm140, %v128, %v129
    %v150 = vsel %vm140, %v127, %v128
    %v151 = vsel %vm140, %v126, %v127
    %v152 = vsel %vm140, %v125, %v126
    %v153 = vsel %vm140, %v124, %v125
    %v154 = vsel %vm140, %v123, %v124
    %v155 = vsel %vm140, %v122, %v123
    %v156 = vsel %vm140, %v137, %v122
    %v157 = vlaneseq
    %v158 = vand.u32 %v157, 127
    %v159 = vadd.s32 %v139, 8
    %v160 = vadd.s32 %v139, 16
    %v161 = vadd.s32 %v139, 24
    %v162 = vadd.s32 %v139, 32
    %v163 = vadd.s32 %v139, 40
    %v164 = vadd.s32 %v139, 48
    %v165 = vadd.s32 %v139, 56
    %v166 = vadd.s32 %v139, 64
    %v167 = vadd.s32 %v139, 72
    %v168 = vadd.s32 %v139, 80
    %v169 = vadd.s32 %v139, 88
    %v170 = vadd.s32 %v139, 96
    %v171 = vadd.s32 %v139, 104
    %v172 = vadd.s32 %v139, 112
    %v173 = vadd.s32 %v139, 120
    %vm174 = vcmp.gt.s32.totalorder %v158, 0
    %191 = vrot.lane.b32.xlu0 %v106, 113
    %v192 = vpop.permute.xlu0 %191
    %193 = vrot.lane.b32.xlu0 %v107, 113
    %v194 = vpop.permute.xlu0 %193
    %195 = vrot.lane.b32.xlu0 %v108, 113
    %v196 = vpop.permute.xlu0 %195
    %197 = vrot.lane.b32.xlu0 %v109, 113
    %v198 = vpop.permute.xlu0 %197
    %199 = vrot.lane.b32.xlu0 %v110, 113
    %v200 = vpop.permute.xlu0 %199
    %201 = vrot.lane.b32.xlu0 %v111, 113
    %v202 = vpop.permute.xlu0 %201
    %203 = vrot.lane.b32.xlu0 %v112, 113
    %v204 = vpop.permute.xlu0 %203
    %205 = vrot.lane.b32.xlu0 %v113, 113
    %v206 = vpop.permute.xlu0 %205
    %207 = vrot.lane.b32.xlu0 %v114, 113
    %v208 = vpop.permute.xlu0 %207
    %209 = vrot.lane.b32.xlu0 %v115, 113
    %v210 = vpop.permute.xlu0 %209
    %211 = vrot.lane.b32.xlu0 %v116, 113
    %v212 = vpop.permute.xlu0 %211
    %213 = vrot.lane.b32.xlu0 %v117, 113
    %v214 = vpop.permute.xlu0 %213
    %215 = vrot.lane.b32.xlu0 %v118, 113
    %v216 = vpop.permute.xlu0 %215
    %217 = vrot.lane.b32.xlu0 %v119, 113
    %v218 = vpop.permute.xlu0 %217
    %219 = vrot.lane.b32.xlu0 %v120, 113
    %v220 = vpop.permute.xlu0 %219
    %221 = vrot.lane.b32.xlu0 %v121, 113
    %v222 = vpop.permute.xlu0 %221
    %v239 = vsub.f32 %v9, %v192
    %v240 = vsub.f32 %v10, %v194
    %v241 = vsub.f32 %v11, %v196
    %v242 = vsub.f32 %v12, %v198
    %v243 = vsub.f32 %v13, %v200
    %v244 = vsub.f32 %v14, %v202
    %v245 = vsub.f32 %v15, %v204
    %v246 = vsub.f32 %v16, %v206
    %v247 = vsub.f32 %v17, %v208
    %v248 = vsub.f32 %v18, %v210
    %v249 = vsub.f32 %v19, %v212
    %v250 = vsub.f32 %v20, %v214
    %v251 = vsub.f32 %v21, %v216
    %v252 = vsub.f32 %v22, %v218
    %v253 = vsub.f32 %v23, %v220
    %v254 = vsub.f32 %v24, %v222
    %v255 = vand.u32 2147483647, %v239
    %v256 = vand.u32 2147483647, %v240
    %v257 = vand.u32 2147483647, %v241
    %v258 = vand.u32 2147483647, %v242
    %v259 = vand.u32 2147483647, %v243
    %v260 = vand.u32 2147483647, %v244
    %v261 = vand.u32 2147483647, %v245
    %v262 = vand.u32 2147483647, %v246
    %v263 = vand.u32 2147483647, %v247
    %v264 = vand.u32 2147483647, %v248
    %v265 = vand.u32 2147483647, %v249
    %v266 = vand.u32 2147483647, %v250
    %v267 = vand.u32 2147483647, %v251
    %v268 = vand.u32 2147483647, %v252
    %v269 = vand.u32 2147483647, %v253
    %v270 = vand.u32 2147483647, %v254
    %v271 = vsel %vm174, %v255, 0.0
    %v272 = vsel %vm174, %v256, 0.0
    %v273 = vsel %vm174, %v257, 0.0
    %v274 = vsel %vm174, %v258, 0.0
    %v275 = vsel %vm174, %v259, 0.0
    %v276 = vsel %vm174, %v260, 0.0
    %v277 = vsel %vm174, %v261, 0.0
    %v278 = vsel %vm174, %v262, 0.0
    %v279 = vsel %vm174, %v263, 0.0
    %v280 = vsel %vm174, %v264, 0.0
    %v281 = vsel %vm174, %v265, 0.0
    %v282 = vsel %vm174, %v266, 0.0
    %v283 = vsel %vm174, %v267, 0.0
    %v284 = vsel %vm174, %v268, 0.0
    %v285 = vsel %vm174, %v269, 0.0
    %v286 = vsel %vm174, %v270, 0.0
    %vm287 = vcmp.lt.s32.totalorder %v139, 0
    %v288 = vsub.s32 0, %v139
    %v289 = vsel %vm287, %v288, %v139
    %v290 = vshrl.u32 %v289, 4
    %v291 = vand.u32 %v289, 15
    %v292 = vsub.s32 0, %v291
    %v293 = vsel %vm287, %v292, %v291
    %vm294 = vcmp.lt.s32.totalorder %v159, 0
    %v295 = vsub.s32 0, %v159
    %v296 = vsel %vm294, %v295, %v159
    %v297 = vshrl.u32 %v296, 4
    %v298 = vand.u32 %v296, 15
    %v299 = vsub.s32 0, %v298
    %v300 = vsel %vm294, %v299, %v298
    %vm301 = vcmp.lt.s32.totalorder %v160, 0
    %v302 = vsub.s32 0, %v160
    %v303 = vsel %vm301, %v302, %v160
    %v304 = vshrl.u32 %v303, 4
    %v305 = vand.u32 %v303, 15
    %v306 = vsub.s32 0, %v305
    %v307 = vsel %vm301, %v306, %v305
    %vm308 = vcmp.lt.s32.totalorder %v161, 0
    %v309 = vsub.s32 0, %v161
    %v310 = vsel %vm308, %v309, %v161
    %v311 = vshrl.u32 %v310, 4
    %v312 = vand.u32 %v310, 15
    %v313 = vsub.s32 0, %v312
    %v314 = vsel %vm308, %v313, %v312
    %vm315 = vcmp.lt.s32.totalorder %v162, 0
    %v316 = vsub.s32 0, %v162
    %v317 = vsel %vm315, %v316, %v162
    %v318 = vshrl.u32 %v317, 4
    %v319 = vand.u32 %v317, 15
    %v320 = vsub.s32 0, %v319
    %v321 = vsel %vm315, %v320, %v319
    %vm322 = vcmp.lt.s32.totalorder %v163, 0
    %v323 = vsub.s32 0, %v163
    %v324 = vsel %vm322, %v323, %v163
    %v325 = vshrl.u32 %v324, 4
    %v326 = vand.u32 %v324, 15
    %v327 = vsub.s32 0, %v326
    %v328 = vsel %vm322, %v327, %v326
    %vm329 = vcmp.lt.s32.totalorder %v164, 0
    %v330 = vsub.s32 0, %v164
    %v331 = vsel %vm329, %v330, %v164
    %v332 = vshrl.u32 %v331, 4
    %v333 = vand.u32 %v331, 15
    %v334 = vsub.s32 0, %v333
    %v335 = vsel %vm329, %v334, %v333
    %vm336 = vcmp.lt.s32.totalorder %v165, 0
    %v337 = vsub.s32 0, %v165
    %v338 = vsel %vm336, %v337, %v165
    %v339 = vshrl.u32 %v338, 4
    %v340 = vand.u32 %v338, 15
    %v341 = vsub.s32 0, %v340
    %v342 = vsel %vm336, %v341, %v340
    %vm343 = vcmp.lt.s32.totalorder %v166, 0
    %v344 = vsub.s32 0, %v166
    %v345 = vsel %vm343, %v344, %v166
    %v346 = vshrl.u32 %v345, 4
    %v347 = vand.u32 %v345, 15
    %v348 = vsub.s32 0, %v347
    %v349 = vsel %vm343, %v348, %v347
    %vm350 = vcmp.lt.s32.totalorder %v167, 0
    %v351 = vsub.s32 0, %v167
    %v352 = vsel %vm350, %v351, %v167
    %v353 = vshrl.u32 %v352, 4
    %v354 = vand.u32 %v352, 15
    %v355 = vsub.s32 0, %v354
    %v356 = vsel %vm350, %v355, %v354
    %vm357 = vcmp.lt.s32.totalorder %v168, 0
    %v358 = vsub.s32 0, %v168
    %v359 = vsel %vm357, %v358, %v168
    %v360 = vshrl.u32 %v359, 4
    %v361 = vand.u32 %v359, 15
    %v362 = vsub.s32 0, %v361
    %v363 = vsel %vm357, %v362, %v361
    %vm364 = vcmp.lt.s32.totalorder %v169, 0
    %v365 = vsub.s32 0, %v169
    %v366 = vsel %vm364, %v365, %v169
    %v367 = vshrl.u32 %v366, 4
    %v368 = vand.u32 %v366, 15
    %v369 = vsub.s32 0, %v368
    %v370 = vsel %vm364, %v369, %v368
    %vm371 = vcmp.lt.s32.totalorder %v170, 0
    %v372 = vsub.s32 0, %v170
    %v373 = vsel %vm371, %v372, %v170
    %v374 = vshrl.u32 %v373, 4
    %v375 = vand.u32 %v373, 15
    %v376 = vsub.s32 0, %v375
    %v377 = vsel %vm371, %v376, %v375
    %vm378 = vcmp.lt.s32.totalorder %v171, 0
    %v379 = vsub.s32 0, %v171
    %v380 = vsel %vm378, %v379, %v171
    %v381 = vshrl.u32 %v380, 4
    %v382 = vand.u32 %v380, 15
    %v383 = vsub.s32 0, %v382
    %v384 = vsel %vm378, %v383, %v382
    %vm385 = vcmp.lt.s32.totalorder %v172, 0
    %v386 = vsub.s32 0, %v172
    %v387 = vsel %vm385, %v386, %v172
    %v388 = vshrl.u32 %v387, 4
    %v389 = vand.u32 %v387, 15
    %v390 = vsub.s32 0, %v389
    %v391 = vsel %vm385, %v390, %v389
    %vm392 = vcmp.lt.s32.totalorder %v173, 0
    %v393 = vsub.s32 0, %v173
    %v394 = vsel %vm392, %v393, %v173
    %v395 = vshrl.u32 %v394, 4
    %v396 = vand.u32 %v394, 15
    %v397 = vsub.s32 0, %v396
    %v398 = vsel %vm392, %v397, %v396
    %vm399 = vcmp.ne.s32.totalorder %v293, 0
    %vm400 = vcmp.ne.s32.totalorder %v300, 0
    %vm401 = vcmp.ne.s32.totalorder %v307, 0
    %vm402 = vcmp.ne.s32.totalorder %v314, 0
    %vm403 = vcmp.ne.s32.totalorder %v321, 0
    %vm404 = vcmp.ne.s32.totalorder %v328, 0
    %vm405 = vcmp.ne.s32.totalorder %v335, 0
    %vm406 = vcmp.ne.s32.totalorder %v342, 0
    %vm407 = vcmp.ne.s32.totalorder %v349, 0
    %vm408 = vcmp.ne.s32.totalorder %v356, 0
    %vm409 = vcmp.ne.s32.totalorder %v363, 0
    %vm410 = vcmp.ne.s32.totalorder %v370, 0
    %vm411 = vcmp.ne.s32.totalorder %v377, 0
    %vm412 = vcmp.ne.s32.totalorder %v384, 0
    %vm413 = vcmp.ne.s32.totalorder %v391, 0
    %vm414 = vcmp.ne.s32.totalorder %v398, 0
    %vm415 = vcmp.lt.s32.totalorder %v293, 0
    %vm416 = vcmp.lt.s32.totalorder %v300, 0
    %vm417 = vcmp.lt.s32.totalorder %v307, 0
    %vm418 = vcmp.lt.s32.totalorder %v314, 0
    %vm419 = vcmp.lt.s32.totalorder %v321, 0
    %vm420 = vcmp.lt.s32.totalorder %v328, 0
    %vm421 = vcmp.lt.s32.totalorder %v335, 0
    %vm422 = vcmp.lt.s32.totalorder %v342, 0
    %vm423 = vcmp.lt.s32.totalorder %v349, 0
    %vm424 = vcmp.lt.s32.totalorder %v356, 0
    %vm425 = vcmp.lt.s32.totalorder %v363, 0
    %vm426 = vcmp.lt.s32.totalorder %v370, 0
    %vm427 = vcmp.lt.s32.totalorder %v377, 0
    %vm428 = vcmp.lt.s32.totalorder %v384, 0
    %vm429 = vcmp.lt.s32.totalorder %v391, 0
    %vm430 = vcmp.lt.s32.totalorder %v398, 0
    %vm431 = vmand %vm415, %vm399
    %vm432 = vmand %vm416, %vm400
    %vm433 = vmand %vm417, %vm401
    %vm434 = vmand %vm418, %vm402
    %vm435 = vmand %vm419, %vm403
    %vm436 = vmand %vm420, %vm404
    %vm437 = vmand %vm421, %vm405
    %vm438 = vmand %vm422, %vm406
    %vm439 = vmand %vm423, %vm407
    %vm440 = vmand %vm424, %vm408
    %vm441 = vmand %vm425, %vm409
    %vm442 = vmand %vm426, %vm410
    %vm443 = vmand %vm427, %vm411
    %vm444 = vmand %vm428, %vm412
    %vm445 = vmand %vm429, %vm413
    %vm446 = vmand %vm430, %vm414
    %v447 = vadd.s32 %v293, 16
    %v448 = vadd.s32 %v300, 16
    %v449 = vadd.s32 %v307, 16
    %v450 = vadd.s32 %v314, 16
    %v451 = vadd.s32 %v321, 16
    %v452 = vadd.s32 %v328, 16
    %v453 = vadd.s32 %v335, 16
    %v454 = vadd.s32 %v342, 16
    %v455 = vadd.s32 %v349, 16
    %v456 = vadd.s32 %v356, 16
    %v457 = vadd.s32 %v363, 16
    %v458 = vadd.s32 %v370, 16
    %v459 = vadd.s32 %v377, 16
    %v460 = vadd.s32 %v384, 16
    %v461 = vadd.s32 %v391, 16
    %v462 = vadd.s32 %v398, 16
    %v463 = vsel %vm431, %v447, %v293
    %v464 = vsel %vm432, %v448, %v300
    %v465 = vsel %vm433, %v449, %v307
    %v466 = vsel %vm434, %v450, %v314
    %v467 = vsel %vm435, %v451, %v321
    %v468 = vsel %vm436, %v452, %v328
    %v469 = vsel %vm437, %v453, %v335
    %v470 = vsel %vm438, %v454, %v342
    %v471 = vsel %vm439, %v455, %v349
    %v472 = vsel %vm440, %v456, %v356
    %v473 = vsel %vm441, %v457, %v363
    %v474 = vsel %vm442, %v458, %v370
    %v475 = vsel %vm443, %v459, %v377
    %v476 = vsel %vm444, %v460, %v384
    %v477 = vsel %vm445, %v461, %v391
    %v478 = vsel %vm446, %v462, %v398
    %vm479 = vcmp.gt.s32.totalorder %v463, 0
    %vm480 = vcmp.gt.s32.totalorder %v464, 0
    %vm481 = vcmp.gt.s32.totalorder %v465, 0
    %vm482 = vcmp.gt.s32.totalorder %v466, 0
    %vm483 = vcmp.gt.s32.totalorder %v467, 0
    %vm484 = vcmp.gt.s32.totalorder %v468, 0
    %vm485 = vcmp.gt.s32.totalorder %v469, 0
    %vm486 = vcmp.gt.s32.totalorder %v470, 0
    %vm487 = vcmp.gt.s32.totalorder %v471, 0
    %vm488 = vcmp.gt.s32.totalorder %v472, 0
    %vm489 = vcmp.gt.s32.totalorder %v473, 0
    %vm490 = vcmp.gt.s32.totalorder %v474, 0
    %vm491 = vcmp.gt.s32.totalorder %v475, 0
    %vm492 = vcmp.gt.s32.totalorder %v476, 0
    %vm493 = vcmp.gt.s32.totalorder %v477, 0
    %vm494 = vcmp.gt.s32.totalorder %v478, 0
    %v495 = vsub.f32 %v9, %v156
    %v496 = vsub.f32 %v10, %v155
    %v497 = vsub.f32 %v11, %v154
    %v498 = vsub.f32 %v12, %v153
    %v499 = vsub.f32 %v13, %v152
    %v500 = vsub.f32 %v14, %v151
    %v501 = vsub.f32 %v15, %v150
    %v502 = vsub.f32 %v16, %v149
    %v503 = vsub.f32 %v17, %v148
    %v504 = vsub.f32 %v18, %v147
    %v505 = vsub.f32 %v19, %v146
    %v506 = vsub.f32 %v20, %v145
    %v507 = vsub.f32 %v21, %v144
    %v508 = vsub.f32 %v22, %v143
    %v509 = vsub.f32 %v23, %v142
    %v510 = vsub.f32 %v24, %v141
    %v511 = vand.u32 2147483647, %v495
    %v512 = vand.u32 2147483647, %v496
    %v513 = vand.u32 2147483647, %v497
    %v514 = vand.u32 2147483647, %v498
    %v515 = vand.u32 2147483647, %v499
    %v516 = vand.u32 2147483647, %v500
    %v517 = vand.u32 2147483647, %v501
    %v518 = vand.u32 2147483647, %v502
    %v519 = vand.u32 2147483647, %v503
    %v520 = vand.u32 2147483647, %v504
    %v521 = vand.u32 2147483647, %v505
    %v522 = vand.u32 2147483647, %v506
    %v523 = vand.u32 2147483647, %v507
    %v524 = vand.u32 2147483647, %v508
    %v525 = vand.u32 2147483647, %v509
    %v526 = vand.u32 2147483647, %v510
    %v527 = vsel %vm479, %v511, 0.0
    %v528 = vsel %vm480, %v512, 0.0
    %v529 = vsel %vm481, %v513, 0.0
    %v530 = vsel %vm482, %v514, 0.0
    %v531 = vsel %vm483, %v515, 0.0
    %v532 = vsel %vm484, %v516, 0.0
    %v533 = vsel %vm485, %v517, 0.0
    %v534 = vsel %vm486, %v518, 0.0
    %v535 = vsel %vm487, %v519, 0.0
    %v536 = vsel %vm488, %v520, 0.0
    %v537 = vsel %vm489, %v521, 0.0
    %v538 = vsel %vm490, %v522, 0.0
    %v539 = vsel %vm491, %v523, 0.0
    %v540 = vsel %vm492, %v524, 0.0
    %v541 = vsel %vm493, %v525, 0.0
    %v542 = vsel %vm494, %v526, 0.0
    %v543 = vadd.f32 %v271, %v527
    %v544 = vadd.f32 %v272, %v528
    %v545 = vadd.f32 %v273, %v529
    %v546 = vadd.f32 %v274, %v530
    %v547 = vadd.f32 %v275, %v531
    %v548 = vadd.f32 %v276, %v532
    %v549 = vadd.f32 %v277, %v533
    %v550 = vadd.f32 %v278, %v534
    %v551 = vadd.f32 %v279, %v535
    %v552 = vadd.f32 %v280, %v536
    %v553 = vadd.f32 %v281, %v537
    %v554 = vadd.f32 %v282, %v538
    %v555 = vadd.f32 %v283, %v539
    %v556 = vadd.f32 %v284, %v540
    %v557 = vadd.f32 %v285, %v541
    %v558 = vadd.f32 %v286, %v542
    %vm559 = vcmask 130048
    %v560 = vsel %vm559, %v543, 0.0
    %v561 = vsel %vm559, %v544, 0.0
    %v562 = vadd.f32 %v560, %v561
    %v563 = vsel %vm559, %v545, 0.0
    %v564 = vadd.f32 %v562, %v563
    %v565 = vsel %vm559, %v546, 0.0
    %v566 = vadd.f32 %v564, %v565
    %v567 = vsel %vm559, %v547, 0.0
    %v568 = vadd.f32 %v566, %v567
    %v569 = vsel %vm559, %v548, 0.0
    %v570 = vadd.f32 %v568, %v569
    %v571 = vsel %vm559, %v549, 0.0
    %v572 = vadd.f32 %v570, %v571
    %v573 = vsel %vm559, %v550, 0.0
    %v574 = vadd.f32 %v572, %v573
    %v575 = vsel %vm559, %v551, 0.0
    %v576 = vadd.f32 %v574, %v575
    %v577 = vsel %vm559, %v552, 0.0
    %v578 = vadd.f32 %v576, %v577
    %v579 = vsel %vm559, %v553, 0.0
    %v580 = vadd.f32 %v578, %v579
    %v581 = vsel %vm559, %v554, 0.0
    %v582 = vadd.f32 %v580, %v581
    %v583 = vsel %vm559, %v555, 0.0
    %v584 = vadd.f32 %v582, %v583
    %v585 = vsel %vm559, %v556, 0.0
    %v586 = vadd.f32 %v584, %v585
    %v587 = vsel %vm559, %v557, 0.0
    %v588 = vadd.f32 %v586, %v587
    %v589 = vsel %vm559, %v558, 0.0
    %v590 = vadd.f32 %v588, %v589
    %591 = vadd.xlane.f32.xlu0 %v590
    %v592 = vpop.xlane.xlu0 %591
    %v593 = vrot.slane %v592, 4
    %v594 = vadd.f32 %v592, %v593
    %v595 = vrot.slane %v594, 2
    %v596 = vadd.f32 %v594, %v595
    %v597 = vrot.slane %v596, 1
    %v598 = vadd.f32 %v596, %v597
    %s599 = vtos %v598
    %vm600 = vcmp.eq.s32.totalorder %v139, 0
    %vm601 = vcmp.eq.s32.totalorder %v158, 0
    %vm602 = vmand %vm600, %vm601
    %v603 = vstv %s599
    %v604 = vsel %vm602, %v603, 0.0
    %605 = vst [vmem:[#allocation2] sm:$0xff] %v604
    // Predicated region
    $region6: #{tpu_custom_call.1} parent=1 // pred_check
      _
    $region7: #{tpu_custom_call.1} parent=1 // pred_check_branch
      %607 = sbr.rel (0) target = $region9
    $region8: #{tpu_custom_call.1} parent=1 // pred_region
      %s609 = ssub.s32 128, 128
      %610 = vsyncadd [#allocation3], %s609
      %s612 = sshll.u32 [#allocation2], 4
      %s613 = int_to_ptr.vmem [resolvable:$true] %s612
      %615 = dma.vmem_to_hbm [thread:$0]  %s613, 128, %s1, [#allocation3]
    $region9: #{tpu_custom_call.1} parent=1 // pred_fallthru
      _
    // Predicated region
    $region10: #{tpu_custom_call.1} parent=1 // pred_check
      _
    $region11: #{tpu_custom_call.1} parent=1 // pred_check_branch
      %617 = sbr.rel (0) target = $region13
    $region12: #{tpu_custom_call.1} parent=1 // pred_region
      %618 = dma.done [#allocation3], 128
    $region13: #{tpu_custom_call.1} parent=1 // pred_fallthru
      _
    %619 = vsyncpa [#allocation3], 1

</llo_original>
